<compile_context>
chip_gen: v5e
topology: v5e:2x2
jax: 0.10.0
libtpu: 0.0.40
codegen_flags: <defaults>
</compile_context>

<pallas_src>
import functools

import jax
import jax.numpy as jnp
from jax import lax
from jax.experimental import pallas as pl
from jax.experimental.pallas import tpu as pltpu

_LANES = 128
_SUBLANES = 8
_MAX_BLOCK_ROWS = 2048    # 2048 x 128 x 4 B = 1 MiB (f32) per operand per grid step
_MAX_CORES = 2


def _cdiv(a, b):
    return -(-a // b)


def _detect_num_tensorcores():
    """Best-effort detection of TensorCores per chip (2 on v7x, else 1)."""
    try:
        dev = jax.devices()[0]
    except Exception:
        return 1
    for attr in ("num_cores", "core_count", "num_tensorcores"):
        v = getattr(dev, attr, None)
        try:
            v = int(v)
        except (TypeError, ValueError):
            continue
        if 1 <= v <= 8:
            return min(v, _MAX_CORES)
    kind = str(getattr(dev, "device_kind", "")).lower()
    if "v7" in kind:
        return _MAX_CORES
    return 1


_NUM_CORES = _detect_num_tensorcores()
_CORE_PARALLEL_OK = False


def _choose_block_rows(rows, itemsize):
    """Largest block row count <= _MAX_BLOCK_ROWS, sublane-aligned for the dtype."""
    mult = _SUBLANES * max(1, 4 // max(1, itemsize))   # 8 (f32), 16 (bf16), 32 (i8)
    if rows >= _MAX_BLOCK_ROWS:
        return _MAX_BLOCK_ROWS
    if rows < mult or rows % mult == 0:
        return rows
    return (rows // mult) * mult


def _elementwise_loss(kind, d):
    if kind == "mse":
        return d * d
    ad = jnp.abs(d)                       # Smooth-L1, beta = 1.0 (PyTorch default)
    return jnp.where(ad < 1.0, 0.5 * d * d, ad - 0.5)


def _tail_sum(kind, p_tail, g_tail):
    d = p_tail.astype(jnp.float32) - g_tail.astype(jnp.float32)
    return jnp.sum(_elementwise_loss(kind, d))


def _prepare_operands(p, g):
    """Flatten (free for contiguous arrays) and view as (rows, 128).

    Returns (p2, g2, tail) where tail is None or a pair of <128-element flat
    arrays handled by a tiny jnp op in the jitted wrapper (never re-materialize
    the whole operand just because numel % 128 != 0)."""
    pf = p.reshape(-1)
    gf = g.reshape(-1)
    n = pf.shape[0]
    n_main = (n // _LANES) * _LANES
    tail = None
    if n_main == 0:
        # Tiny stream (< 128 elements): pad to one lane row; zeros contribute 0.
        pad = _LANES - n
        pf = jnp.pad(pf, (0, pad))
        gf = jnp.pad(gf, (0, pad))
        n_main = _LANES
    elif n_main < n:
        tail = (pf[n_main:], gf[n_main:])
        pf = pf[:n_main]
        gf = gf[:n_main]
    return pf.reshape(-1, _LANES), gf.reshape(-1, _LANES), tail


def _make_kernel(streams, n_inner, ncores):
    """streams: list of dicts with kind / n_blocks / blocks_per_core / mask info."""
    n_streams = len(streams)

    def kernel(*refs):
        in_refs = refs[:2 * n_streams]
        out_refs = refs[2 * n_streams:3 * n_streams]
        acc_refs = refs[3 * n_streams:]

        if ncores > 1:
            c = pl.program_id(0)   # TensorCore index (CORE_PARALLEL)
            j = pl.program_id(1)   # row-block index within this core ("arbitrary")
        else:
            c = 0
            j = pl.program_id(0)

        # zero the per-stream VMEM accumulators at the start of each core's pass
        @pl.when(j == 0)
        def _zero():
            for a in acc_refs:
                a[...] = jnp.zeros(a.shape, a.dtype)

        for s, st in enumerate(streams):
            p_ref = in_refs[2 * s]
            g_ref = in_refs[2 * s + 1]
            acc = acc_refs[s]
            bpc = st["blocks_per_core"]
            nb = st["n_blocks"]
            blk = c * bpc + j if ncores > 1 else j   # global row-block index

            def _accum(masked, p_ref=p_ref, g_ref=g_ref, acc=acc, st=st):
                d = p_ref[...].astype(jnp.float32) - g_ref[...].astype(jnp.float32)
                val = _elementwise_loss(st["kind"], d)
                if masked:
                    # last (partial) block: rows past the array edge are
                    # undefined -> zero them (select, so garbage cannot leak).
                    row = lax.broadcasted_iota(jnp.int32, val.shape, 0)
                    val = jnp.where(row < st["last_valid_rows"], val, 0.0)
                acc[...] += val    # pure VPU work in the steady state

            if st["always_active"]:
                if not st["has_partial"]:
                    _accum(False)                      # unmasked fast path
                elif nb == 1:
                    _accum(True)                       # single (partial) block
                else:
                    is_last = blk == nb - 1
                    pl.when(is_last)(lambda f=_accum: f(True))
                    pl.when(jnp.logical_not(is_last))(lambda f=_accum: f(False))
            else:
                active = jnp.logical_and(j < bpc, blk < nb)
                if st["has_partial"]:
                    is_last = blk == nb - 1
                    pl.when(jnp.logical_and(active, is_last))(
                        lambda f=_accum: f(True))
                    pl.when(jnp.logical_and(active, jnp.logical_not(is_last)))(
                        lambda f=_accum: f(False))
                else:
                    pl.when(active)(lambda f=_accum: f(False))

        # one cross-lane reduction per stream, once per core, at the last step.
        # Every core writes its full (8,128) output tile (zero if it had no
        # active blocks), so the wrapper's partial combine is well-defined.
        @pl.when(j == n_inner - 1)
        def _finalize():
            for s in range(n_streams):
                total = jnp.sum(acc_refs[s][...])
                out_refs[s][...] = jnp.zeros(out_refs[s].shape, jnp.float32) + total

    return kernel


def _make_in_spec(st, ncores):
    bpc = st["blocks_per_core"]
    nb = st["n_blocks"]
    clamp = not st["always_active"]   # inactive steps must not DMA out of bounds
    if ncores > 1:
        if clamp:
            idx = lambda c, j, bpc=bpc, nb=nb: (jnp.minimum(c * bpc + j, nb - 1), 0)
        else:
            idx = lambda c, j, bpc=bpc: (c * bpc + j, 0)
    else:
        if clamp:
            idx = lambda j, nb=nb: (jnp.minimum(j, nb - 1), 0)
        else:
            idx = lambda j: (j, 0)
    return pl.BlockSpec((st["block_rows"], _LANES), idx)


def _fused_loss_sums(streams, ncores):
    """streams: list of (kind, pred, gt).  Returns a tuple of f32 scalar sums."""
    meta, operands, tails = [], [], []
    for kind, p, g in streams:
        assert p.shape == g.shape, \
            "[Loss]: The dim of prediction and ground truth don't match!"
        p2, g2, tail = _prepare_operands(p, g)
        rows = p2.shape[0]
        itemsize = min(p2.dtype.itemsize, g2.dtype.itemsize)
        block_rows = _choose_block_rows(rows, itemsize)
        n_blocks = _cdiv(rows, block_rows)
        meta.append(dict(
            kind=kind, rows=rows, block_rows=block_rows, n_blocks=n_blocks,
            blocks_per_core=_cdiv(n_blocks, ncores),
            has_partial=(rows % block_rows != 0),
            last_valid_rows=rows - (n_blocks - 1) * block_rows))
        operands += [p2, g2]
        tails.append(tail)

    n_inner = max(st["blocks_per_core"] for st in meta)
    for st in meta:
        st["always_active"] = (st["blocks_per_core"] == n_inner
                               and st["blocks_per_core"] * ncores == st["n_blocks"])

    kernel = _make_kernel(meta, n_inner, ncores)

    in_specs = []
    for st in meta:
        spec = _make_in_spec(st, ncores)
        in_specs += [spec, spec]

    if ncores > 1:
        out_idx = lambda c, j: (c, 0)
        grid = (ncores, n_inner)
        dims = (getattr(pltpu, "CORE_PARALLEL", "parallel"),
                getattr(pltpu, "ARBITRARY", "arbitrary"))
    else:
        out_idx = lambda j: (0, 0)
        grid = (n_inner,)
        dims = ("arbitrary",)

    out_shape = tuple(
        jax.ShapeDtypeStruct((ncores * _SUBLANES, _LANES), jnp.float32) for _ in meta)
    out_specs = tuple(pl.BlockSpec((_SUBLANES, _LANES), out_idx) for _ in meta)
    scratch_shapes = [pltpu.VMEM((st["block_rows"], _LANES), jnp.float32) for st in meta]

    # VMEM budget from the real footprint: double-buffered input blocks per
    # operand + f32 accumulator per stream + (tiny) output tiles, with headroom
    # for Mosaic internals.
    footprint = 0
    for s, st in enumerate(meta):
        blk = st["block_rows"] * _LANES
        p2, g2 = operands[2 * s], operands[2 * s + 1]
        footprint += 2 * blk * (p2.dtype.itemsize + g2.dtype.itemsize)  # 2 buffers
        footprint += blk * 4                                            # accumulator
        footprint += 2 * _SUBLANES * _LANES * 4                         # output tile
    vmem_limit = min(max(int(footprint * 1.75) + (4 << 20), 16 << 20), 64 << 20)

    outs = pl.pallas_call(
        kernel,
        out_shape=out_shape,
        grid=grid,
        in_specs=in_specs,
        out_specs=out_specs,
        scratch_shapes=scratch_shapes,
        compiler_params=pltpu.CompilerParams(
            dimension_semantics=dims,
            vmem_limit_bytes=vmem_limit),
    )(*operands)
    if not isinstance(outs, (tuple, list)):
        outs = (outs,)

    results = []
    for s, st in enumerate(meta):
        # each core fills its (8,128) tile with its partial sum; this strided
        # combine and the optional tail fuse inside the jitted wrapper.
        total = jnp.sum(outs[s][0::_SUBLANES, 0])
        if tails[s] is not None:
            total = total + _tail_sum(st["kind"], *tails[s])
        results.append(total)
    return tuple(results)


@functools.partial(jax.jit,
                   static_argnames=("alpha", "reduction", "use_aux", "ncores"))
def _vector_loss_jit(pred, gt, aux_pred, aux_gt, *, alpha, reduction, use_aux, ncores):
    batch_size = pred.shape[0]
    streams = [("mse", pred, gt)]
    if use_aux:
        streams.append(("smooth_l1", aux_pred, aux_gt))
    sums = _fused_loss_sums(streams, ncores)

    l_traj = sums[0]
    if reduction == 'mean':
        l_traj = l_traj / batch_size
    loss = l_traj
    if use_aux:
        l_node = sums[1]
        if reduction == 'mean':
            l_node = l_node / batch_size
        loss = loss + alpha * l_node
    return loss


class VectorLossPallas:
    """Loss = L_traj (MSE, sum) + alpha * L_node (Smooth-L1, sum). Pallas TPU impl."""

    def __init__(self, alpha=1.0, aux_loss=False, reduction='sum'):
        self.alpha = alpha
        self.aux_loss = aux_loss
        if reduction in ['mean', 'sum']:
            self.reduction = reduction
        else:
            raise NotImplementedError('[Loss]: The reduction has not been implemented!')

    def __call__(self, pred, gt, aux_pred=None, aux_gt=None):
        global _NUM_CORES, _CORE_PARALLEL_OK
        use_aux = self.aux_loss and (aux_pred is not None) and (aux_gt is not None)
        if use_aux:
            assert aux_pred.shape == aux_gt.shape, \
                "[Loss]: The dim of prediction and ground truth don't match!"
        a = aux_pred if use_aux else None
        b = aux_gt if use_aux else None
        kwargs = dict(alpha=float(self.alpha), reduction=self.reduction,
                      use_aux=use_aux)
        if _NUM_CORES > 1:
            # Attempt the 2-TensorCore (CORE_PARALLEL) build; fall back to the
            # single-axis grid if this chip / runtime rejects it.
            try:
                out = _vector_loss_jit(pred, gt, a, b, ncores=_NUM_CORES, **kwargs)
                if not _CORE_PARALLEL_OK:
                    jax.block_until_ready(out)
                    _CORE_PARALLEL_OK = True
                return out
            except Exception:
                _NUM_CORES = 1
        return _vector_loss_jit(pred, gt, a, b, ncores=1, **kwargs)


def _reference_loss(pred, gt, aux_pred, aux_gt, alpha, reduction):
    bs = pred.shape[0]
    l_traj = jnp.sum((pred.astype(jnp.float32) - gt.astype(jnp.float32)) ** 2)
    if reduction == 'mean':
        l_traj = l_traj / bs
    loss = l_traj
    if aux_pred is not None:
        d = aux_pred.astype(jnp.float32) - aux_gt.astype(jnp.float32)
        ad = jnp.abs(d)
        l_node = jnp.sum(jnp.where(ad < 1.0, 0.5 * d * d, ad - 0.5))
        if reduction == 'mean':
            l_node = l_node / bs
        loss = loss + alpha * l_node
    return loss


if __name__ == "__main__":
    key = jax.random.PRNGKey(0)
    k1, k2, k3, k4, k5, k6, k7, k8 = jax.random.split(key, 8)

    # pred/gt: trajectory predictions [batch, horizon, 2]; aux: node features
    batch, horizon = 2, 8
    nodes, feat = 16, 32
    pred = jax.random.normal(k1, (batch, horizon, 2), dtype=jnp.float32)
    gt = jax.random.normal(k2, (batch, horizon, 2), dtype=jnp.float32)
    aux_pred = 2.0 * jax.random.normal(k3, (batch, nodes, feat), dtype=jnp.float32)
    aux_gt = 2.0 * jax.random.normal(k4, (batch, nodes, feat), dtype=jnp.float32)

    # fused (traj + aux) path, sum reduction
    loss_fn = VectorLossPallas(alpha=1.0, aux_loss=True, reduction='sum')
    loss = loss_fn(pred, gt, aux_pred, aux_gt)
    jax.block_until_ready(loss)
    ref = _reference_loss(pred, gt, aux_pred, aux_gt, alpha=1.0, reduction='sum')
    assert jnp.allclose(loss, ref, rtol=1e-5, atol=1e-5), (loss, ref)

    # mean reduction + alpha != 1
    loss_m = VectorLossPallas(alpha=0.5, aux_loss=True, reduction='mean')(
        pred, gt, aux_pred, aux_gt)
    jax.block_until_ready(loss_m)
    ref_m = _reference_loss(pred, gt, aux_pred, aux_gt, alpha=0.5, reduction='mean')
    assert jnp.allclose(loss_m, ref_m, rtol=1e-5, atol=1e-5), (loss_m, ref_m)

    # no-aux path
    loss_na = VectorLossPallas(alpha=1.0, aux_loss=False, reduction='sum')(pred, gt)
    jax.block_until_ready(loss_na)
    ref_na = jnp.sum((pred - gt) ** 2)
    assert jnp.allclose(loss_na, ref_na, rtol=1e-5, atol=1e-5), (loss_na, ref_na)

    # aux_loss=True but aux tensors not supplied -> returns traj loss only (like the spec)
    loss_missing_aux = VectorLossPallas(alpha=1.0, aux_loss=True, reduction='sum')(pred, gt)
    jax.block_until_ready(loss_missing_aux)
    assert jnp.allclose(loss_missing_aux, ref_na, rtol=1e-5, atol=1e-5)

    # larger case: exercises multi-block tiling, last-block-only masking, the
    # main+tail split for a non-128-multiple operand, and (on v7x) the 2-core split
    pred_l = jax.random.normal(k5, (2, 1160, 128), dtype=jnp.float32)
    gt_l = jax.random.normal(k6, (2, 1160, 128), dtype=jnp.float32)
    aux_l = 2.0 * jax.random.normal(k7, (2, 300, 50), dtype=jnp.float32)
    aux_gl = 2.0 * jax.random.normal(k8, (2, 300, 50), dtype=jnp.float32)
    loss_l = VectorLossPallas(alpha=1.0, aux_loss=True, reduction='sum')(
        pred_l, gt_l, aux_l, aux_gl)
    jax.block_until_ready(loss_l)
    ref_l = _reference_loss(pred_l, gt_l, aux_l, aux_gl, alpha=1.0, reduction='sum')
    assert jnp.allclose(loss_l, ref_l, rtol=1e-4, atol=1e-2), (loss_l, ref_l)

    print("KERNEL_OK")
</pallas_src>

<mosaic_0001>
module attributes {stable_mosaic.version = 11 : i64} {
  func.func @kernel(%arg0: i32, %arg1: memref<1x128xf32, #tpu.memory_space<vmem>>, %arg2: memref<1x128xf32, #tpu.memory_space<vmem>>, %arg3: memref<8x128xf32, #tpu.memory_space<vmem>>, %arg4: memref<8x128xf32, #tpu.memory_space<vmem>>, %arg5: memref<8x128xf32, #tpu.memory_space<vmem>>, %arg6: memref<8x128xf32, #tpu.memory_space<vmem>>, %arg7: memref<1x128xf32, #tpu.memory_space<vmem>>, %arg8: memref<8x128xf32, #tpu.memory_space<vmem>>) attributes {dimension_semantics = [#tpu.dimension_semantics<arbitrary>], iteration_bounds = array<i64: 1>, scalar_prefetch = 0 : i64, scratch_operands = 2 : i64, tpu.core_type = #tpu.core_type<tc>, window_params = [{transform_indices = @transform_0, window_bounds = array<i64: 1, 128>}, {transform_indices = @transform_1, window_bounds = array<i64: 1, 128>}, {transform_indices = @transform_2, window_bounds = array<i64: 8, 128>}, {transform_indices = @transform_3, window_bounds = array<i64: 8, 128>}, {pipeline_mode = #tpu.pipeline_mode<synchronous>, transform_indices = @transform_4, window_bounds = array<i64: 8, 128>}, {pipeline_mode = #tpu.pipeline_mode<synchronous>, transform_indices = @transform_5, window_bounds = array<i64: 8, 128>}]} {
    %c0_i32 = arith.constant 0 : i32
    %0 = arith.cmpi eq, %arg0, %c0_i32 : i32
    %1 = arith.extui %0 : i1 to i32
    %c0_i32_0 = arith.constant 0 : i32
    %2 = arith.cmpi ne, %1, %c0_i32_0 : i32
    scf.if %2 {
      %cst_20 = arith.constant 0.000000e+00 : f32
      %28 = vector.broadcast %cst_20 : f32 to vector<1x128xf32>
      %c0_21 = arith.constant 0 : index
      %c0_22 = arith.constant 0 : index
      %29 = vector.load %arg7[%c0_21, %c0_22] : memref<1x128xf32, #tpu.memory_space<vmem>>, vector<1x128xf32>
      tpu.vector_store %arg7[%c0_21, %c0_22], %28 {strides = array<i32>} : memref<1x128xf32, #tpu.memory_space<vmem>>, vector<1x128xf32>,
      %cst_23 = arith.constant 0.000000e+00 : f32
      %30 = vector.broadcast %cst_23 : f32 to vector<8x128xf32>
      %c0_24 = arith.constant 0 : index
      %c0_25 = arith.constant 0 : index
      %31 = vector.load %arg8[%c0_24, %c0_25] : memref<8x128xf32, #tpu.memory_space<vmem>>, vector<8x128xf32>
      tpu.vector_store %arg8[%c0_24, %c0_25], %30 {strides = array<i32>} : memref<8x128xf32, #tpu.memory_space<vmem>>, vector<8x128xf32>,
    } else {
    }
    %c0 = arith.constant 0 : index
    %c0_1 = arith.constant 0 : index
    %3 = vector.load %arg1[%c0, %c0_1] : memref<1x128xf32, #tpu.memory_space<vmem>>, vector<1x128xf32>
    %c0_2 = arith.constant 0 : index
    %c0_3 = arith.constant 0 : index
    %4 = vector.load %arg2[%c0_2, %c0_3] : memref<1x128xf32, #tpu.memory_space<vmem>>, vector<1x128xf32>
    %5 = arith.subf %3, %4 : vector<1x128xf32>
    %6 = arith.mulf %5, %5 : vector<1x128xf32>
    %c0_4 = arith.constant 0 : index
    %c0_5 = arith.constant 0 : index
    %7 = vector.load %arg7[%c0_4, %c0_5] : memref<1x128xf32, #tpu.memory_space<vmem>>, vector<1x128xf32>
    %8 = arith.addf %7, %6 : vector<1x128xf32>
    %c0_6 = arith.constant 0 : index
    %c0_7 = arith.constant 0 : index
    %9 = vector.load %arg7[%c0_6, %c0_7] : memref<1x128xf32, #tpu.memory_space<vmem>>, vector<1x128xf32>
    tpu.vector_store %arg7[%c0_6, %c0_7], %8 {strides = array<i32>} : memref<1x128xf32, #tpu.memory_space<vmem>>, vector<1x128xf32>,
    %c0_8 = arith.constant 0 : index
    %c0_9 = arith.constant 0 : index
    %10 = vector.load %arg3[%c0_8, %c0_9] : memref<8x128xf32, #tpu.memory_space<vmem>>, vector<8x128xf32>
    %c0_10 = arith.constant 0 : index
    %c0_11 = arith.constant 0 : index
    %11 = vector.load %arg4[%c0_10, %c0_11] : memref<8x128xf32, #tpu.memory_space<vmem>>, vector<8x128xf32>
    %12 = arith.subf %10, %11 : vector<8x128xf32>
    %13 = math.absf %12 : vector<8x128xf32>
    %cst = arith.constant 1.000000e+00 : f32
    %14 = vector.broadcast %cst : f32 to vector<8x128xf32>
    %15 = arith.cmpf olt, %13, %14 : vector<8x128xf32>
    %cst_12 = arith.constant 5.000000e-01 : f32
    %16 = vector.broadcast %cst_12 : f32 to vector<8x128xf32>
    %17 = arith.mulf %16, %12 : vector<8x128xf32>
    %18 = arith.mulf %17, %12 : vector<8x128xf32>
    %cst_13 = arith.constant 5.000000e-01 : f32
    %19 = vector.broadcast %cst_13 : f32 to vector<8x128xf32>
    %20 = arith.subf %13, %19 : vector<8x128xf32>
    %21 = arith.select %15, %18, %20 : vector<8x128xi1>, vector<8x128xf32>
    %c0_14 = arith.constant 0 : index
    %c0_15 = arith.constant 0 : index
    %22 = vector.load %arg8[%c0_14, %c0_15] : memref<8x128xf32, #tpu.memory_space<vmem>>, vector<8x128xf32>
    %23 = arith.addf %22, %21 : vector<8x128xf32>
    %c0_16 = arith.constant 0 : index
    %c0_17 = arith.constant 0 : index
    %24 = vector.load %arg8[%c0_16, %c0_17] : memref<8x128xf32, #tpu.memory_space<vmem>>, vector<8x128xf32>
    tpu.vector_store %arg8[%c0_16, %c0_17], %23 {strides = array<i32>} : memref<8x128xf32, #tpu.memory_space<vmem>>, vector<8x128xf32>,
    %c0_i32_18 = arith.constant 0 : i32
    %25 = arith.cmpi eq, %arg0, %c0_i32_18 : i32
    %26 = arith.extui %25 : i1 to i32
    %c0_i32_19 = arith.constant 0 : i32
    %27 = arith.cmpi ne, %26, %c0_i32_19 : i32
    scf.if %27 {
      %c0_20 = arith.constant 0 : index
      %c0_21 = arith.constant 0 : index
      %28 = vector.load %arg7[%c0_20, %c0_21] : memref<1x128xf32, #tpu.memory_space<vmem>>, vector<1x128xf32>
      %29 = vector.shape_cast %28 : vector<1x128xf32> to vector<1x1x128xf32>
      %cst_22 = arith.constant dense<0.000000e+00> : vector<1xf32>
      %30 = vector.multi_reduction <add>, %29, %cst_22 [1, 2] : vector<1x1x128xf32> to vector<1xf32>
      %31 = vector.shape_cast %30 : vector<1xf32> to vector<1x1x1xf32>
      %32 = vector.extract %31[0, 0, 0] : f32 from vector<1x1x1xf32>
      %cst_23 = arith.constant 0.000000e+00 : f32
      %33 = vector.broadcast %cst_23 : f32 to vector<8x128xf32>
      %34 = vector.broadcast %32 : f32 to vector<8x128xf32>
      %35 = arith.addf %33, %34 : vector<8x128xf32>
      %c0_24 = arith.constant 0 : index
      %c0_25 = arith.constant 0 : index
      %36 = vector.load %arg5[%c0_24, %c0_25] : memref<8x128xf32, #tpu.memory_space<vmem>>, vector<8x128xf32>
      tpu.vector_store %arg5[%c0_24, %c0_25], %35 {strides = array<i32>} : memref<8x128xf32, #tpu.memory_space<vmem>>, vector<8x128xf32>,
      %c0_26 = arith.constant 0 : index
      %c0_27 = arith.constant 0 : index
      %37 = vector.load %arg8[%c0_26, %c0_27] : memref<8x128xf32, #tpu.memory_space<vmem>>, vector<8x128xf32>
      %38 = vector.shape_cast %37 : vector<8x128xf32> to vector<1x8x128xf32>
      %cst_28 = arith.constant dense<0.000000e+00> : vector<1xf32>
      %39 = vector.multi_reduction <add>, %38, %cst_28 [1, 2] : vector<1x8x128xf32> to vector<1xf32>
      %40 = vector.shape_cast %39 : vector<1xf32> to vector<1x1x1xf32>
      %41 = vector.extract %40[0, 0, 0] : f32 from vector<1x1x1xf32>
      %cst_29 = arith.constant 0.000000e+00 : f32
      %42 = vector.broadcast %cst_29 : f32 to vector<8x128xf32>
      %43 = vector.broadcast %41 : f32 to vector<8x128xf32>
      %44 = arith.addf %42, %43 : vector<8x128xf32>
      %c0_30 = arith.constant 0 : index
      %c0_31 = arith.constant 0 : index
      %45 = vector.load %arg6[%c0_30, %c0_31] : memref<8x128xf32, #tpu.memory_space<vmem>>, vector<8x128xf32>
      tpu.vector_store %arg6[%c0_30, %c0_31], %44 {strides = array<i32>} : memref<8x128xf32, #tpu.memory_space<vmem>>, vector<8x128xf32>,
    } else {
    }
    return
  }
  func.func @transform_0(%arg0: i32) -> (i32, i32) {
    %c0_i32 = arith.constant 0 : i32
    %c0_i32_0 = arith.constant 0 : i32
    return %arg0, %c0_i32 : i32, i32
  }
  func.func @transform_1(%arg0: i32) -> (i32, i32) {
    %c0_i32 = arith.constant 0 : i32
    %c0_i32_0 = arith.constant 0 : i32
    return %arg0, %c0_i32 : i32, i32
  }
  func.func @transform_2(%arg0: i32) -> (i32, i32) {
    %c0_i32 = arith.constant 0 : i32
    %c0_i32_0 = arith.constant 0 : i32
    return %arg0, %c0_i32 : i32, i32
  }
  func.func @transform_3(%arg0: i32) -> (i32, i32) {
    %c0_i32 = arith.constant 0 : i32
    %c0_i32_0 = arith.constant 0 : i32
    return %arg0, %c0_i32 : i32, i32
  }
  func.func @transform_4(%arg0: i32) -> (i32, i32) {
    %c0_i32 = arith.constant 0 : i32
    %c0_i32_0 = arith.constant 0 : i32
    %c0_i32_1 = arith.constant 0 : i32
    return %c0_i32, %c0_i32_0 : i32, i32
  }
  func.func @transform_5(%arg0: i32) -> (i32, i32) {
    %c0_i32 = arith.constant 0 : i32
    %c0_i32_0 = arith.constant 0 : i32
    %c0_i32_1 = arith.constant 0 : i32
    return %c0_i32, %c0_i32_0 : i32, i32
  }
}

</mosaic_0001>

<llo_original>
// kernel: _vector_loss_jit.1
$region0: #{_vector_loss_jit.1}
  #allocation0 [shape = 'u32[]', space=smem, size = 0x4, offset = 0x4, fixed_abs, tag = 'smem constant byte address 0x4 - core index']
  #allocation1 [shape = 'u32[72,128]{1,0:T(1,128)}', space=vmem, size = 0x9000, scoped, tag = 'internal scratch']
  #allocation2 [shape = 'f32[1,128]{1,0:T(1,128)}', space=vmem, size = 0x200, scoped, tag = 'scratch operand']
  #allocation3 [shape = 'f32[8,128]{1,0:T(8,128)}', space=vmem, size = 0x1000, scoped, tag = 'scratch operand']
  %s0 = inlined_call_operand.vmem [shape: f32[1,128], index: 0, kind: input, shape index: {}]
  %s1 = inlined_call_operand.vmem [shape: f32[1,128], index: 1, kind: input, shape index: {}]
  %s2 = inlined_call_operand.vmem [shape: f32[8,128], index: 2, kind: input, shape index: {}]
  %s3 = inlined_call_operand.vmem [shape: f32[8,128], index: 3, kind: input, shape index: {}]
  %s4 = inlined_call_operand.vmem [shape: f32[8,128], index: 4, kind: output, shape index: {0}]
  %s5 = inlined_call_operand.vmem [shape: f32[8,128], index: 5, kind: output, shape index: {1}]
  %6 = xla_tuple %s4, %s5
  %s7 = sld [smem:[#allocation0]]
  $region42: #{_vector_loss_jit.1} parent=0
    _
  %s9 = ssub.s32 1, %s7
  %s10 = scalar_select 0, %s9, %s7
  // Predicated region
  $region2: #{_vector_loss_jit.1} parent=0 // pred_check
    _
  $region3: #{_vector_loss_jit.1} parent=0 // pred_check_branch
    %12 = sbr.rel (0) target = $region5
  $region4: #{_vector_loss_jit.1} parent=0 // pred_region
    _
  $region5: #{_vector_loss_jit.1} parent=0 // pred_fallthru
    _
  // Predicated region
  $region6: #{_vector_loss_jit.1} parent=0 // pred_check
    _
  $region7: #{_vector_loss_jit.1} parent=0 // pred_check_branch
    %14 = sbr.rel (0) target = $region9
  $region8: #{_vector_loss_jit.1} parent=0 // pred_region
    _
  $region9: #{_vector_loss_jit.1} parent=0 // pred_fallthru
    _
  // Predicated region
  $region10: #{_vector_loss_jit.1} parent=0 // pred_check
    _
  $region11: #{_vector_loss_jit.1} parent=0 // pred_check_branch
    %16 = sbr.rel (0) target = $region13
  $region12: #{_vector_loss_jit.1} parent=0 // pred_region
    _
  $region13: #{_vector_loss_jit.1} parent=0 // pred_fallthru
    _
  // Predicated region
  $region14: #{_vector_loss_jit.1} parent=0 // pred_check
    _
  $region15: #{_vector_loss_jit.1} parent=0 // pred_check_branch
    %18 = sbr.rel (0) target = $region17
  $region16: #{_vector_loss_jit.1} parent=0 // pred_region
    _
  $region17: #{_vector_loss_jit.1} parent=0 // pred_fallthru
    _
  %p19 = scmp.eq.s32.totalorder 0, 0
  // Predicated region
  $region18: #{_vector_loss_jit.1} parent=0 // pred_check
    %p20 = pneg %p19
  $region19: #{_vector_loss_jit.1} parent=0 // pred_check_branch
    %22 = sbr.rel (%p20) target = $region21
  $region20: #{_vector_loss_jit.1} parent=0 // pred_region
    %23 = vst [vmem:[#allocation2] sm:$0x1] 0.0
    %24 = vst [vmem:[#allocation3] sm:$0xff] 0.0
  $region21: #{_vector_loss_jit.1} parent=0 // pred_fallthru
    _
  %v25 = vld [vmem:[%s0] sm:$0x1]
  %v26 = vld [vmem:[%s1] sm:$0x1]
  %v27 = vsub.f32 %v25, %v26
  %v28 = vmul.f32 %v27, %v27
  %v29 = vld [vmem:[#allocation2] sm:$0x1]
  %v30 = vadd.f32 %v29, %v28
  %31 = vst [vmem:[#allocation2] sm:$0x1] %v30
  %v32 = vld [vmem:[%s2] sm:$0xff]
  %v33 = vld [vmem:[%s3] sm:$0xff]
  %v34 = vsub.f32 %v32, %v33
  %v35 = vand.u32 2147483647, %v34
  %vm36 = vcmp.lt.f32.partialorder %v35, 1.0
  %v37 = vmul.f32 %v34, 0.5
  %v38 = vmul.f32 %v37, %v34
  %v39 = vsub.f32 %v35, 0.5
  %v40 = vsel %vm36, %v38, %v39
  %v41 = vld [vmem:[#allocation3] sm:$0xff]
  %v42 = vadd.f32 %v41, %v40
  %43 = vst [vmem:[#allocation3] sm:$0xff] %v42
  // Predicated region
  $region22: #{_vector_loss_jit.1} parent=0 // pred_check
    %p44 = pneg %p19
  $region23: #{_vector_loss_jit.1} parent=0 // pred_check_branch
    %46 = sbr.rel (%p44) target = $region25
  $region24: #{_vector_loss_jit.1} parent=0 // pred_region
    %v47 = vld [vmem:[#allocation2] sm:$0x1]
    %vm48 = vcmask 1040384
    %v49 = vsel %vm48, %v47, 0.0
    %50 = vadd.xlane.f32.xlu0 %v49
    %v51 = vpop.xlane.xlu0 %50
    %v52 = vrot.slane %v51, 4
    %v53 = vadd.f32 %v51, %v52
    %v54 = vrot.slane %v53, 2
    %v55 = vadd.f32 %v53, %v54
    %v56 = vrot.slane %v55, 1
    %v57 = vadd.f32 %v55, %v56
    %s58 = vtos %v57
    %v59 = vstv %s58
    %v60 = vadd.f32 %v59, 0.0
    %61 = vst [vmem:[%s4] sm:$0xff] %v60
    %v62 = vld [vmem:[#allocation3] sm:$0xff]
    %63 = vadd.xlane.f32.xlu0 %v62
    %v64 = vpop.xlane.xlu0 %63
    %v65 = vrot.slane %v64, 4
    %v66 = vadd.f32 %v64, %v65
    %v67 = vrot.slane %v66, 2
    %v68 = vadd.f32 %v66, %v67
    %v69 = vrot.slane %v68, 1
    %v70 = vadd.f32 %v68, %v69
    %s71 = vtos %v70
    %v72 = vstv %s71
    %v73 = vadd.f32 %v72, 0.0
    %74 = vst [vmem:[%s5] sm:$0xff] %v73
  $region25: #{_vector_loss_jit.1} parent=0 // pred_fallthru
    _
  // Predicated region
  $region26: #{_vector_loss_jit.1} parent=0 // pred_check
    _
  $region27: #{_vector_loss_jit.1} parent=0 // pred_check_branch
    %76 = sbr.rel (0) target = $region29
  $region28: #{_vector_loss_jit.1} parent=0 // pred_region
    _
  $region29: #{_vector_loss_jit.1} parent=0 // pred_fallthru
    _
  // Predicated region
  $region30: #{_vector_loss_jit.1} parent=0 // pred_check
    _
  $region31: #{_vector_loss_jit.1} parent=0 // pred_check_branch
    %78 = sbr.rel (0) target = $region33
  $region32: #{_vector_loss_jit.1} parent=0 // pred_region
    _
  $region33: #{_vector_loss_jit.1} parent=0 // pred_fallthru
    _
  // Predicated region
  $region34: #{_vector_loss_jit.1} parent=0 // pred_check
    _
  $region35: #{_vector_loss_jit.1} parent=0 // pred_check_branch
    %80 = sbr.rel (0) target = $region37
  $region36: #{_vector_loss_jit.1} parent=0 // pred_region
    _
  $region37: #{_vector_loss_jit.1} parent=0 // pred_fallthru
    _
  // Predicated region
  $region38: #{_vector_loss_jit.1} parent=0 // pred_check
    _
  $region39: #{_vector_loss_jit.1} parent=0 // pred_check_branch
    %82 = sbr.rel (0) target = $region41
  $region40: #{_vector_loss_jit.1} parent=0 // pred_region
    _
  $region41: #{_vector_loss_jit.1} parent=0 // pred_fallthru
    _

</llo_original>
